<compile_context>
chip_gen: v7x
topology: tpu7x:2x2x1
jax: 0.10.0
libtpu: 0.0.40
codegen_flags: <defaults>
</compile_context>

<pallas_src>
import functools

import jax
import jax.numpy as jnp
from jax import lax
from jax.experimental import pallas as pl
from jax.experimental.pallas import tpu as pltpu

_LN_EPS = 1e-5


# ----------------------------- hardware-aware config -----------------------------

def _vmem_limit_bytes():
    """Generation-aware scoped-VMEM limit: ~75% of physical VMEM with >=16 MiB headroom.
    v7x (64 MiB) -> 48 MiB, v5e/v6e (128 MiB) -> 96 MiB."""
    cap = 128 * 1024 * 1024
    try:
        cap = int(pltpu.get_tpu_info().vmem_capacity_bytes)
    except Exception:
        pass
    return max(min(int(cap * 0.75), cap - 16 * 1024 * 1024), 16 * 1024 * 1024)


def _pick_tile(n, quantum, target):
    """Largest multiple of `quantum` dividing n and <= target; full extent n otherwise."""
    target = int(max(target, quantum))
    if n <= target or n % quantum:
        return n
    t = (min(target, n) // quantum) * quantum
    while t >= quantum:
        if n % t == 0:
            return t
        t -= quantum
    return n


def _row_budget(vmem_limit, resident_bytes, row_bytes, cap=1024):
    """Rows per seq tile so streamed (double-buffered) blocks fit ~60% of the VMEM limit."""
    avail = int(vmem_limit * 0.6) - int(resident_bytes)
    rows = max(avail // max(int(row_bytes), 1), 8)
    return int(min(rows, cap))


# ----------------------------- in-kernel math helpers -----------------------------

def _layernorm(x):
    # PyTorch nn.LayerNorm semantics: biased variance over the last dim, eps=1e-5, f32.
    mu = jnp.mean(x, axis=-1, keepdims=True)
    xc = x - mu
    var = jnp.mean(xc * xc, axis=-1, keepdims=True)
    return xc * lax.rsqrt(var + _LN_EPS)


def _erf(x, approx_recip):
    # Abramowitz & Stegun 7.1.26 polynomial erf (max abs err ~1.5e-7); matches exact-erf
    # torch.nn.GELU() to f32 precision. The 1/(1+p*|x|) goes through the EUP reciprocal
    # so the VALU slot stays free for the FF matmul filler work.
    a1, a2, a3, a4, a5 = 0.254829592, -0.284496736, 1.421413741, -1.453152027, 1.061405429
    p = 0.3275911
    sign = jnp.where(x >= 0.0, 1.0, -1.0)
    ax = jnp.abs(x)
    t = pl.reciprocal(1.0 + p * ax, approx=approx_recip)
    poly = ((((a5 * t + a4) * t + a3) * t + a2) * t + a1) * t
    return sign * (1.0 - poly * jnp.exp(-ax * ax))


def _gelu_exact(x, approx_recip=False):
    return 0.5 * x * (1.0 + _erf(x * 0.7071067811865476, approx_recip))


# ----------------------------- fused cond projection -----------------------------

def _cond_proj_kernel(c_ref, w_ref, b_ref, o_ref):
    c = c_ref[...]
    s = c * jax.nn.sigmoid(c)          # SiLU computed once for every cond projection
    o_ref[...] = jnp.dot(s, w_ref[...], preferred_element_type=jnp.float32) + b_ref[...]


def cond_projections(c, w, b, vmem_limit):
    B, Dc = c.shape
    Do = w.shape[1]
    return pl.pallas_call(
        _cond_proj_kernel,
        out_shape=jax.ShapeDtypeStruct((B, Do), jnp.float32),
        grid=(1,),
        in_specs=[
            pl.BlockSpec((B, Dc), lambda i: (0, 0)),
            pl.BlockSpec((Dc, Do), lambda i: (0, 0)),
            pl.BlockSpec((1, Do), lambda i: (0, 0)),
        ],
        out_specs=pl.BlockSpec((B, Do), lambda i: (0, 0)),
        compiler_params=pltpu.CompilerParams(
            dimension_semantics=("arbitrary",), vmem_limit_bytes=vmem_limit),
    )(c, w, b)


# ----------------------------- AdaLN + fused QKV projection -----------------------------

def _adaln_qkv_kernel(x_ref, gb_ref, w_ref, o_ref, *, dim, compute_dtype):
    x = x_ref[0]                                   # (tn, D) f32
    gb = gb_ref[0]                                 # (1, 2D) f32: [gamma | beta]
    y = (_layernorm(x) * gb[:, :dim] + gb[:, dim:]).astype(compute_dtype)
    # One fused Q|K|V matmul (attention scale dh**-0.5 pre-folded into the Q columns):
    # a single wide MXU pipeline and one lane-dense store instead of three narrow ones.
    o_ref[0] = jnp.dot(y, w_ref[...], preferred_element_type=jnp.float32).astype(o_ref.dtype)


def adaln_qkv(x, gb, w_qkv, compute_dtype, vmem_limit, max_seq_tile=None):
    B, N, D = x.shape
    d3 = w_qkv.shape[1]                            # 3 * heads * dim_head
    cb = jnp.dtype(compute_dtype).itemsize
    quantum = 16 if cb == 2 else 8
    resident = 2 * D * d3 * cb + 2 * 2 * D * 4     # weight + gamma/beta, double-buffered
    row_bytes = 2 * (D * 4 + d3 * cb)              # streamed x input + qkv output
    tn = _pick_tile(N, quantum,
                    min(_row_budget(vmem_limit, resident, row_bytes),
                        max_seq_tile or N))
    kern = functools.partial(_adaln_qkv_kernel, dim=D, compute_dtype=compute_dtype)
    return pl.pallas_call(
        kern,
        out_shape=jax.ShapeDtypeStruct((B, N, d3), compute_dtype),
        grid=(B, N // tn),
        in_specs=[
            pl.BlockSpec((1, tn, D), lambda b, j: (b, j, 0)),
            pl.BlockSpec((1, 1, 2 * D), lambda b, j: (b, 0, 0)),
            pl.BlockSpec((D, d3), lambda b, j: (0, 0)),
        ],
        out_specs=pl.BlockSpec((1, tn, d3), lambda b, j: (b, j, 0)),
        compiler_params=pltpu.CompilerParams(
            dimension_semantics=("parallel", "parallel"),
            vmem_limit_bytes=vmem_limit),
    )(x, gb, w_qkv)


# ----------------------------- joint attention (online softmax) -----------------------------

def _joint_attn_kernel(*refs, nm, heads, dim_head, di, split, approx_recip):
    per_m = 3 if split else 1
    in_refs = refs[:per_m * nm]
    o_refs = refs[per_m * nm:]

    def read(m, which, lo, width):
        # which: 0=q, 1=k, 2=v; loads a (N_m, width) lane slice straight from the VMEM block.
        if split:
            return in_refs[per_m * m + which][0, :, lo:lo + width]
        base = which * di + lo
        return in_refs[m][0, :, base:base + width]

    for mq in range(nm):                            # query modality
        for h in range(heads):                      # TODO(synk): heads grid axis once dim_head % 128 == 0
            lo = h * dim_head
            qh = read(mq, 0, lo, dim_head)          # scale pre-folded into W_q
            m_run = jnp.full((qh.shape[0], 1), -jnp.inf, jnp.float32)
            l_run = jnp.zeros((qh.shape[0], 1), jnp.float32)
            acc = jnp.zeros((qh.shape[0], dim_head), jnp.float32)
            # Flash-style online softmax over the key/value modalities: no K/V concat is
            # ever materialized (neither in HBM nor VMEM) and K/V stay in compute dtype.
            for mk in range(nm):
                kh = read(mk, 1, lo, dim_head)
                vh = read(mk, 2, lo, dim_head)
                s = lax.dot_general(qh, kh, (((1,), (1,)), ((), ())),
                                    preferred_element_type=jnp.float32)      # (Nq, Nk) f32
                m_new = jnp.maximum(m_run, jnp.max(s, axis=-1, keepdims=True))
                alpha = jnp.exp(m_run - m_new)
                p = jnp.exp(s - m_new)
                l_run = alpha * l_run + jnp.sum(p, axis=-1, keepdims=True)
                acc = alpha * acc + jnp.dot(p.astype(vh.dtype), vh,
                                            preferred_element_type=jnp.float32)
                m_run = m_new
            inv = pl.reciprocal(l_run, approx=approx_recip)
            # Direct per-head store into the output lane slice: no head-output concat and
            # only one head's logits/probs are live at a time.
            o_refs[mq][0, :, lo:lo + dim_head] = (acc * inv).astype(o_refs[mq].dtype)


def joint_attention(qkvs, heads, dim_head, compute_dtype, vmem_limit):
    nm = len(qkvs)
    B = qkvs[0].shape[0]
    di = heads * dim_head
    seq_lens = [int(a.shape[1]) for a in qkvs]
    # Pick Q/K/V out of the fused [.., 3*di] array by BlockSpec block index along the lane
    # axis whenever di is lane-aligned; otherwise fall back to in-kernel lane slicing.
    split = (di % 128 == 0)
    approx = bool(jnp.dtype(compute_dtype) == jnp.dtype(jnp.bfloat16))
    kern = functools.partial(_joint_attn_kernel, nm=nm, heads=heads, dim_head=dim_head,
                             di=di, split=split, approx_recip=approx)
    inputs, in_specs = [], []
    for m, n in enumerate(seq_lens):
        if split:
            for sel in range(3):
                inputs.append(qkvs[m])
                in_specs.append(pl.BlockSpec((1, n, di), lambda b, s=sel: (b, 0, s)))
        else:
            inputs.append(qkvs[m])
            in_specs.append(pl.BlockSpec((1, n, 3 * di), lambda b: (b, 0, 0)))
    out_shape = tuple(jax.ShapeDtypeStruct((B, n, di), compute_dtype) for n in seq_lens)
    out_specs = tuple(pl.BlockSpec((1, n, di), lambda b: (b, 0, 0)) for n in seq_lens)
    return pl.pallas_call(
        kern,
        out_shape=out_shape,
        grid=(B,),
        in_specs=in_specs,
        out_specs=out_specs,
        compiler_params=pltpu.CompilerParams(
            dimension_semantics=("parallel",), vmem_limit_bytes=vmem_limit),
    )(*inputs)


# ----------------------------- out-proj + residual + AdaLN + FF (Dh-tiled) -----------------------------

def _out_ff_kernel(ao_ref, wout_ref, cond_ref, res_ref, w1_ref, b1_ref, w2_ref, b2_ref,
                   o_ref, y_scr, acc_scr, *, dim, compute_dtype, approx_recip):
    k = pl.program_id(2)
    cond = cond_ref[0]            # (1, 4D): [attn_post_g | ff_ln_g | ff_ln_b | ff_post_g]

    @pl.when(k == 0)
    def _():
        branch = jnp.dot(ao_ref[0], wout_ref[...], preferred_element_type=jnp.float32)
        x1 = res_ref[0] + branch * cond[:, :dim]            # attn residual add
        o_ref[0] = x1                                       # residual parked in the output block
        y_scr[...] = _layernorm(x1) * cond[:, dim:2 * dim] + cond[:, 2 * dim:3 * dim]
        acc_scr[...] = jnp.zeros_like(acc_scr)

    # One FF hidden-dim tile: (tn, tDh) GELU intermediate, accumulated into f32 (tn, D).
    h = jnp.dot(y_scr[...].astype(compute_dtype), w1_ref[...],
                preferred_element_type=jnp.float32) + b1_ref[...]
    h = _gelu_exact(h, approx_recip).astype(compute_dtype)
    acc_scr[...] += jnp.dot(h, w2_ref[...], preferred_element_type=jnp.float32)

    @pl.when(k == pl.num_programs(2) - 1)
    def _():
        o_ref[0] = o_ref[0] + (acc_scr[...] + b2_ref[...]) * cond[:, 3 * dim:]   # ff residual add


def out_ff(attn_out, w_out, cond_m, x_res, w1, b1, w2, b2, compute_dtype, vmem_limit,
           max_seq_tile=None, max_ff_tile=None):
    B, N, di = attn_out.shape
    D = w_out.shape[1]
    Dh = w1.shape[1]
    cb = jnp.dtype(compute_dtype).itemsize
    quantum = 16 if cb == 2 else 8

    # FF hidden-dim tile: bounds streamed W1/W2 tiles + the f32 GELU intermediate
    # independent of model width (critical on v7x's 64 MiB VMEM).
    tdh_target = max(int(vmem_limit * 0.25) // max(4 * D * cb, 1), 128)
    tdh = _pick_tile(Dh, 128 if Dh % 128 == 0 else Dh,
                     min(tdh_target, max_ff_tile or Dh))

    resident = 2 * cb * (di * D + D * tdh + tdh * D) + 2 * 4 * (4 * D + Dh)
    row_bytes = 2 * (di * cb + 2 * D * 4) + 4 * (2 * D + tdh)   # streamed blocks + scratch + hidden
    tn = _pick_tile(N, quantum,
                    min(_row_budget(vmem_limit, resident, row_bytes),
                        max_seq_tile or N))

    kern = functools.partial(_out_ff_kernel, dim=D, compute_dtype=compute_dtype,
                             approx_recip=(cb == 2))
    # TODO(synk): optional bf16 output dtype for the residual stream (v5e HBM-store relief).
    return pl.pallas_call(
        kern,
        out_shape=jax.ShapeDtypeStruct((B, N, D), jnp.float32),
        grid=(B, N // tn, Dh // tdh),
        in_specs=[
            pl.BlockSpec((1, tn, di), lambda b, j, k: (b, j, 0)),
            pl.BlockSpec((di, D), lambda b, j, k: (0, 0)),
            pl.BlockSpec((1, 1, 4 * D), lambda b, j, k: (b, 0, 0)),
            pl.BlockSpec((1, tn, D), lambda b, j, k: (b, j, 0)),
            pl.BlockSpec((D, tdh), lambda b, j, k: (0, k)),
            pl.BlockSpec((1, tdh), lambda b, j, k: (0, k)),
            pl.BlockSpec((tdh, D), lambda b, j, k: (k, 0)),
            pl.BlockSpec((1, D), lambda b, j, k: (0, 0)),
        ],
        out_specs=pl.BlockSpec((1, tn, D), lambda b, j, k: (b, j, 0)),
        scratch_shapes=[pltpu.VMEM((tn, D), jnp.float32),     # LN'd FF input, reused per Dh step
                        pltpu.VMEM((tn, D), jnp.float32)],    # f32 accumulator for the W2 matmul
        compiler_params=pltpu.CompilerParams(
            dimension_semantics=("parallel", "parallel", "arbitrary"),
            vmem_limit_bytes=vmem_limit),
    )(attn_out, w_out, cond_m, x_res, w1, b1, w2, b2)


# ----------------------------- parameters -----------------------------

def init_params(key, dims, dim_cond, heads, dim_head, ff_mult=4):
    di = heads * dim_head
    keys = iter(jax.random.split(key, 128))

    def nrm(shape, std):
        return jax.random.normal(next(keys), shape, jnp.float32) * std

    p = dict(dims=tuple(dims), heads=heads, dim_head=dim_head, dim_cond=dim_cond)
    total = sum(dims)
    # to_post_branch_gammas: Linear(dim_cond, sum(dims)*2) (random init so the cond path is exercised)
    p["post_w"] = nrm((dim_cond, 2 * total), 0.3 / dim_cond ** 0.5)
    p["post_b"] = nrm((1, 2 * total), 0.02) + 1.0

    for name in ("attn_ln_w", "attn_ln_b", "w_qkv", "w_out",
                 "ff_ln_w", "ff_ln_b", "ff_w1", "ff_b1", "ff_w2", "ff_b2"):
        p[name] = []

    for d in dims:
        dh_ff = ff_mult * d
        # AdaLN cond linears: Linear(dim_cond, 2*d)
        p["attn_ln_w"].append(nrm((dim_cond, 2 * d), 0.3 / dim_cond ** 0.5))
        p["attn_ln_b"].append(jnp.concatenate(
            [nrm((1, d), 0.02) + 1.0, nrm((1, d), 0.02)], axis=-1))
        p["ff_ln_w"].append(nrm((dim_cond, 2 * d), 0.3 / dim_cond ** 0.5))
        p["ff_ln_b"].append(jnp.concatenate(
            [nrm((1, d), 0.02) + 1.0, nrm((1, d), 0.02)], axis=-1))
        # JointAttention: to_qkv Linear(d, 3*di, bias=False), to_out Linear(di, d, bias=False)
        p["w_qkv"].append(nrm((d, 3 * di), d ** -0.5))
        p["w_out"].append(nrm((di, d), di ** -0.5))
        # FeedForward: Linear(d, 4d) -> GELU -> Linear(4d, d)
        p["ff_w1"].append(nrm((d, dh_ff), d ** -0.5))
        p["ff_b1"].append(nrm((1, dh_ff), 0.02))
        p["ff_w2"].append(nrm((dh_ff, d), dh_ff ** -0.5))
        p["ff_b2"].append(nrm((1, d), 0.02))
    return p


def prepare_params(params, compute_dtype=jnp.bfloat16, max_seq_tile=None, max_ff_tile=None):
    """Kernel-ready parameters: one fused cond matrix with per-consumer contiguous column
    blocks, one fused Q|K|V weight per modality with the attention scale folded into the Q
    columns, and matmul weights cast to the compute dtype."""
    dims = params["dims"]
    heads, dh = params["heads"], params["dim_head"]
    di = heads * dh
    nm = len(dims)
    total = sum(dims)
    cdt = jnp.dtype(compute_dtype)

    # Column order: [attn_ln gamma|beta per modality (2D each)]
    #             + per modality: [attn_post_gamma (D) | ff_ln gamma|beta (2D) | ff_post_gamma (D)]
    post_w, post_b = params["post_w"], params["post_b"]
    cols_w = [params["attn_ln_w"][m] for m in range(nm)]
    cols_b = [params["attn_ln_b"][m] for m in range(nm)]
    off = 0
    for m, d in enumerate(dims):
        cols_w += [post_w[:, off:off + d], params["ff_ln_w"][m],
                   post_w[:, total + off:total + off + d]]
        cols_b += [post_b[:, off:off + d], params["ff_ln_b"][m],
                   post_b[:, total + off:total + off + d]]
        off += d
    cond_w = jnp.concatenate(cols_w, axis=1)
    cond_b = jnp.concatenate(cols_b, axis=1)

    scale = dh ** -0.5
    mods = []
    for m in range(nm):
        wqkv = params["w_qkv"][m]
        wqkv = jnp.concatenate([wqkv[:, :di] * scale, wqkv[:, di:]], axis=1).astype(cdt)
        mods.append(dict(
            w_qkv=wqkv,
            w_out=params["w_out"][m].astype(cdt),
            ff_w1=params["ff_w1"][m].astype(cdt),
            ff_b1=params["ff_b1"][m],
            ff_w2=params["ff_w2"][m].astype(cdt),
            ff_b2=params["ff_b2"][m],
        ))
    return dict(dims=dims, heads=heads, dim_head=dh, compute_dtype=cdt,
                cond_w=cond_w, cond_b=cond_b, mods=mods,
                vmem_limit=_vmem_limit_bytes(),
                max_seq_tile=max_seq_tile, max_ff_tile=max_ff_tile)


# ----------------------------- forward (Pallas) -----------------------------

def mmdit_block_forward(prep, modality_tokens, time_cond):
    dims = prep["dims"]
    heads, dh = prep["heads"], prep["dim_head"]
    cdt = prep["compute_dtype"]
    vlim = prep["vmem_limit"]
    mst, mft = prep["max_seq_tile"], prep["max_ff_tile"]

    # One fused kernel for every cond projection; each consumer then takes one contiguous slice.
    cond = cond_projections(time_cond, prep["cond_w"], prep["cond_b"], vlim)
    attn_gb, mod_cond, off = [], [], 0
    for d in dims:
        attn_gb.append(cond[:, off:off + 2 * d][:, None, :]); off += 2 * d
    for d in dims:
        mod_cond.append(cond[:, off:off + 4 * d][:, None, :]); off += 4 * d

    # AdaLN + fused Q|K|V projection per modality; outputs stay head-merged and lane-dense.
    qkvs = [adaln_qkv(x, attn_gb[m], prep["mods"][m]["w_qkv"], cdt, vlim, mst)
            for m, x in enumerate(modality_tokens)]

    # Joint attention over all modalities' keys via online softmax; q/k/v blocks are picked
    # out of the fused arrays by BlockSpec index -- no host-side slicing/transpose/concat.
    attn_outs = joint_attention(qkvs, heads, dh, cdt, vlim)

    outs = []
    for m, x in enumerate(modality_tokens):
        mp = prep["mods"][m]
        outs.append(out_ff(attn_outs[m], mp["w_out"], mod_cond[m], x,
                           mp["ff_w1"], mp["ff_b1"], mp["ff_w2"], mp["ff_b2"],
                           cdt, vlim, mst, mft))
    return outs


# ----------------------------- pure-JAX reference -----------------------------

def reference_forward(params, modality_tokens, time_cond):
    dims = params["dims"]
    heads, dh = params["heads"], params["dim_head"]
    di = heads * dh
    B = time_cond.shape[0]
    total = sum(dims)
    silu = lambda t: t * jax.nn.sigmoid(t)

    def ln(x):
        mu = x.mean(-1, keepdims=True)
        var = ((x - mu) ** 2).mean(-1, keepdims=True)
        return (x - mu) / jnp.sqrt(var + _LN_EPS)

    post = silu(time_cond) @ params["post_w"] + params["post_b"]
    attn_g_all, ff_g_all = post[:, :total], post[:, total:]

    qs, ks, vs = [], [], []
    residuals = list(modality_tokens)
    for m, x in enumerate(modality_tokens):
        D = dims[m]
        N = x.shape[1]
        gb = silu(time_cond) @ params["attn_ln_w"][m] + params["attn_ln_b"][m]
        y = ln(x) * gb[:, None, :D] + gb[:, None, D:]
        qkv = (y @ params["w_qkv"][m]).reshape(B, N, 3, heads, dh)
        qs.append(jnp.transpose(qkv[:, :, 0], (0, 2, 1, 3)))
        ks.append(jnp.transpose(qkv[:, :, 1], (0, 2, 1, 3)))
        vs.append(jnp.transpose(qkv[:, :, 2], (0, 2, 1, 3)))

    q = jnp.concatenate(qs, axis=2)
    k = jnp.concatenate(ks, axis=2)
    v = jnp.concatenate(vs, axis=2)
    Nt = q.shape[2]
    sim = jnp.einsum("bhid,bhjd->bhij", q, k) * (dh ** -0.5)
    attn = jax.nn.softmax(sim, axis=-1)
    o = jnp.einsum("bhij,bhjd->bhid", attn, v)
    o = o.transpose(0, 2, 1, 3).reshape(B, Nt, di)

    outs = []
    n_off, d_off = 0, 0
    for m, x in enumerate(modality_tokens):
        D = dims[m]
        N = x.shape[1]
        om = o[:, n_off:n_off + N] @ params["w_out"][m]
        om = om * attn_g_all[:, None, d_off:d_off + D]
        x1 = residuals[m] + om
        gb = silu(time_cond) @ params["ff_ln_w"][m] + params["ff_ln_b"][m]
        y = ln(x1) * gb[:, None, :D] + gb[:, None, D:]
        h = jax.nn.gelu(y @ params["ff_w1"][m] + params["ff_b1"][m], approximate=False)
        f = h @ params["ff_w2"][m] + params["ff_b2"][m]
        f = f * ff_g_all[:, None, d_off:d_off + D]
        outs.append(x1 + f)
        n_off += N
        d_off += D
    return outs


# ----------------------------- main -----------------------------

if __name__ == "__main__":
    B = 2
    dim_modalities = (32, 64)
    seq_lens = (8, 16)
    heads = 2
    dim_head = 64          # heads*dim_head = 128 -> lane-aligned fused-QKV block selection
    dim_cond = 8

    root = jax.random.PRNGKey(0)
    kp, kx0, kx1, kc = jax.random.split(root, 4)

    params = init_params(kp, dim_modalities, dim_cond, heads, dim_head)
    modality_tokens = [
        jax.random.normal(kx0, (B, seq_lens[0], dim_modalities[0]), jnp.float32),
        jax.random.normal(kx1, (B, seq_lens[1], dim_modalities[1]), jnp.float32),
    ]
    time_cond = jax.random.normal(kc, (B, dim_cond), jnp.float32)

    refs = [jax.block_until_ready(r)
            for r in reference_forward(params, modality_tokens, time_cond)]

    # 1) f32 compute path: tight tolerance (checks the kernel structure is exact).
    prep32 = prepare_params(params, jnp.float32)
    outs32 = [jax.block_until_ready(o)
              for o in mmdit_block_forward(prep32, modality_tokens, time_cond)]
    err32 = max(float(jnp.max(jnp.abs(o - r))) for o, r in zip(outs32, refs))
    assert err32 < 2e-3, f"f32 path max abs error too large: {err32}"

    # 2) f32 path with forced seq / FF-hidden tiling: exercises the multi-step grid and the
    #    pl.when-finalized Dh accumulator used at production sizes.
    prep_t = prepare_params(params, jnp.float32, max_seq_tile=8, max_ff_tile=128)
    outs_t = [jax.block_until_ready(o)
              for o in mmdit_block_forward(prep_t, modality_tokens, time_cond)]
    err_t = max(float(jnp.max(jnp.abs(o - r))) for o, r in zip(outs_t, refs))
    assert err_t < 2e-3, f"tiled f32 path max abs error too large: {err_t}"

    # 3) bf16 MXU path (optimized config): relative tolerance sized for bf16 operand rounding.
    prep16 = prepare_params(params, jnp.bfloat16)
    outs16 = [jax.block_until_ready(o)
              for o in mmdit_block_forward(prep16, modality_tokens, time_cond)]
    for o, r in zip(outs16, refs):
        assert o.shape == r.shape and o.dtype == jnp.float32
    err16 = max(float(jnp.max(jnp.abs(o - r)) / (jnp.max(jnp.abs(r)) + 1e-6))
                for o, r in zip(outs16, refs))
    assert err16 < 4e-2, f"bf16 path max relative error too large: {err16}"

    print("KERNEL_OK")
</pallas_src>

<mosaic_0001>
module attributes {stable_mosaic.version = 11 : i64} {
  func.func @_cond_proj_kernel(%arg0: i32, %arg1: memref<2x8xf32, #tpu.memory_space<vmem>>, %arg2: memref<8x576xf32, #tpu.memory_space<vmem>>, %arg3: memref<1x576xf32, #tpu.memory_space<vmem>>, %arg4: memref<2x576xf32, #tpu.memory_space<vmem>>) attributes {dimension_semantics = [#tpu.dimension_semantics<arbitrary>], iteration_bounds = array<i64: 1>, scalar_prefetch = 0 : i64, scratch_operands = 0 : i64, tpu.core_type = #tpu.core_type<tc>, window_params = [{pipeline_mode = #tpu.pipeline_mode<synchronous>, transform_indices = @transform_0, window_bounds = array<i64: 2, 8>}, {pipeline_mode = #tpu.pipeline_mode<synchronous>, transform_indices = @transform_1, window_bounds = array<i64: 8, 576>}, {pipeline_mode = #tpu.pipeline_mode<synchronous>, transform_indices = @transform_2, window_bounds = array<i64: 1, 576>}, {pipeline_mode = #tpu.pipeline_mode<synchronous>, transform_indices = @transform_3, window_bounds = array<i64: 2, 576>}]} {
    %c0 = arith.constant 0 : index
    %c0_0 = arith.constant 0 : index
    %0 = vector.load %arg1[%c0, %c0_0] : memref<2x8xf32, #tpu.memory_space<vmem>>, vector<2x8xf32>
    %1 = arith.negf %0 : vector<2x8xf32>
    %2 = math.exp %1 : vector<2x8xf32>
    %cst = arith.constant 1.000000e+00 : f32
    %3 = vector.broadcast %cst : f32 to vector<2x8xf32>
    %4 = arith.addf %3, %2 : vector<2x8xf32>
    %5 = arith.divf %3, %4 : vector<2x8xf32>
    %6 = arith.mulf %0, %5 : vector<2x8xf32>
    %c0_1 = arith.constant 0 : index
    %c0_2 = arith.constant 0 : index
    %7 = vector.load %arg2[%c0_1, %c0_2] : memref<8x576xf32, #tpu.memory_space<vmem>>, vector<8x576xf32>
    %cst_3 = arith.constant dense<0.000000e+00> : vector<2x576xf32>
    %8 = tpu.matmul %6, %7, %cst_3 {dimension_numbers = #tpu.dot_dimension_numbers<[1], [0], [0], [1], [0, 0, 1, 1], [], []>} : vector<2x8xf32>, vector<8x576xf32>, vector<2x576xf32> -> vector<2x576xf32>
    %c0_4 = arith.constant 0 : index
    %c0_5 = arith.constant 0 : index
    %9 = vector.load %arg3[%c0_4, %c0_5] : memref<1x576xf32, #tpu.memory_space<vmem>>, vector<1x576xf32>
    %10 = vector.broadcast %9 : vector<1x576xf32> to vector<2x576xf32>
    %11 = arith.addf %8, %10 : vector<2x576xf32>
    %c0_6 = arith.constant 0 : index
    %c0_7 = arith.constant 0 : index
    %12 = vector.load %arg4[%c0_6, %c0_7] : memref<2x576xf32, #tpu.memory_space<vmem>>, vector<2x576xf32>
    tpu.vector_store %arg4[%c0_6, %c0_7], %11 {strides = array<i32>} : memref<2x576xf32, #tpu.memory_space<vmem>>, vector<2x576xf32>,
    return
  }
  func.func @transform_0(%arg0: i32) -> (i32, i32) {
    %c0_i32 = arith.constant 0 : i32
    %c0_i32_0 = arith.constant 0 : i32
    %c0_i32_1 = arith.constant 0 : i32
    return %c0_i32, %c0_i32_0 : i32, i32
  }
  func.func @transform_1(%arg0: i32) -> (i32, i32) {
    %c0_i32 = arith.constant 0 : i32
    %c0_i32_0 = arith.constant 0 : i32
    %c0_i32_1 = arith.constant 0 : i32
    return %c0_i32, %c0_i32_0 : i32, i32
  }
  func.func @transform_2(%arg0: i32) -> (i32, i32) {
    %c0_i32 = arith.constant 0 : i32
    %c0_i32_0 = arith.constant 0 : i32
    %c0_i32_1 = arith.constant 0 : i32
    return %c0_i32, %c0_i32_0 : i32, i32
  }
  func.func @transform_3(%arg0: i32) -> (i32, i32) {
    %c0_i32 = arith.constant 0 : i32
    %c0_i32_0 = arith.constant 0 : i32
    %c0_i32_1 = arith.constant 0 : i32
    return %c0_i32, %c0_i32_0 : i32, i32
  }
}

</mosaic_0001>

<llo_original>
// kernel: tpu_custom_call.1
$region0: #{tpu_custom_call.1}
  #allocation0 [shape = 'u32[]', space=smem, size = 0x4, offset = 0x4, fixed_abs, tag = 'smem constant byte address 0x4 - core index']
  #allocation1 [shape = 'u32[144,128]{1,0:T(1,128)}', space=vmem, size = 0x12000, scoped, tag = 'internal scratch']
  %s0 = inlined_call_operand.hbm [shape: f32[2,8], index: 0, kind: input, shape index: {}]
  %s1 = inlined_call_operand.hbm [shape: f32[8,576], index: 1, kind: input, shape index: {}]
  %s2 = inlined_call_operand.hbm [shape: f32[1,576], index: 2, kind: input, shape index: {}]
  %s3 = inlined_call_operand.hbm [shape: f32[2,576], index: 3, kind: output, shape index: {}]
  %s4 = sld [smem:[#allocation0]]
  $region34: #{tpu_custom_call.1} parent=0
    _
  %s6 = ssub.s32 1, %s4
  %s7 = scalar_select 0, %s6, %s4
  $region1: #{tpu_custom_call.1} parent=0
    #allocation2 [shape = 'u8[1024]{0}', space=vmem, size = 0x400, scoped, tag = 'input window, operand 0, single buffered']
    #allocation3 [shape = 's32[1]{0}', space=sflag, size = 0x4, scoped, tag = 'scoped memory for tpu_custom_call.1']
    #allocation4 [shape = 's32[1]{0}', space=sflag, size = 0x4, scoped, tag = 'scoped memory for tpu_custom_call.1']
    #allocation5 [shape = 'u8[20480]{0}', space=vmem, size = 0x5000, scoped, tag = 'input window, operand 1, single buffered']
    #allocation6 [shape = 's32[1]{0}', space=sflag, size = 0x4, scoped, tag = 'scoped memory for tpu_custom_call.1']
    #allocation7 [shape = 'u8[2560]{0}', space=vmem, size = 0xc00, scoped, tag = 'input window, operand 2, single buffered']
    #allocation8 [shape = 'u8[5120]{0}', space=vmem, size = 0x1400, scoped, tag = 'output window, operand 0, single buffered']
    %8 = vsyncpa [#allocation3], 0
    %9 = vsyncpa [#allocation6], 0
    %10 = vsyncpa [#allocation4], 0
    // Predicated region
    $region2: #{tpu_custom_call.1} parent=1 // pred_check
      _
    $region3: #{tpu_custom_call.1} parent=1 // pred_check_branch
      %12 = sbr.rel (0) target = $region5
    $region4: #{tpu_custom_call.1} parent=1 // pred_region
      %s14 = ssub.s32 32, 32
      %15 = vsyncadd [#allocation3], %s14
      %s17 = sshll.u32 [#allocation2], 4
      %s18 = int_to_ptr.vmem [resolvable:$true] %s17
      %20 = dma.hbm_to_vmem [thread:$0]  %s0, 32, %s18, [#allocation3]
    $region5: #{tpu_custom_call.1} parent=1 // pred_fallthru
      _
    // Predicated region
    $region6: #{tpu_custom_call.1} parent=1 // pred_check
      _
    $region7: #{tpu_custom_call.1} parent=1 // pred_check_branch
      %22 = sbr.rel (0) target = $region9
    $region8: #{tpu_custom_call.1} parent=1 // pred_region
      %s24 = ssub.s32 640, 640
      %25 = vsyncadd [#allocation6], %s24
      %s27 = sshll.u32 [#allocation5], 4
      %s28 = int_to_ptr.vmem [resolvable:$true] %s27
      %30 = dma.hbm_to_vmem [thread:$0]  %s1, 640, %s28, [#allocation6]
    $region9: #{tpu_custom_call.1} parent=1 // pred_fallthru
      _
    // Predicated region
    $region10: #{tpu_custom_call.1} parent=1 // pred_check
      _
    $region11: #{tpu_custom_call.1} parent=1 // pred_check_branch
      %32 = sbr.rel (0) target = $region13
    $region12: #{tpu_custom_call.1} parent=1 // pred_region
      %s34 = ssub.s32 80, 80
      %35 = vsyncadd [#allocation6], %s34
      %s37 = sshll.u32 [#allocation7], 4
      %s38 = int_to_ptr.vmem [resolvable:$true] %s37
      %40 = dma.hbm_to_vmem [thread:$0]  %s2, 80, %s38, [#allocation6]
    $region13: #{tpu_custom_call.1} parent=1 // pred_fallthru
      _
    // Predicated region
    $region14: #{tpu_custom_call.1} parent=1 // pred_check
      _
    $region15: #{tpu_custom_call.1} parent=1 // pred_check_branch
      %42 = sbr.rel (0) target = $region17
    $region16: #{tpu_custom_call.1} parent=1 // pred_region
      %43 = dma.done [#allocation3], 32
    $region17: #{tpu_custom_call.1} parent=1 // pred_fallthru
      _
    // Predicated region
    $region18: #{tpu_custom_call.1} parent=1 // pred_check
      _
    $region19: #{tpu_custom_call.1} parent=1 // pred_check_branch
      %45 = sbr.rel (0) target = $region21
    $region20: #{tpu_custom_call.1} parent=1 // pred_region
      %46 = dma.done [#allocation6], 640
    $region21: #{tpu_custom_call.1} parent=1 // pred_fallthru
      _
    // Predicated region
    $region22: #{tpu_custom_call.1} parent=1 // pred_check
      _
    $region23: #{tpu_custom_call.1} parent=1 // pred_check_branch
      %48 = sbr.rel (0) target = $region25
    $region24: #{tpu_custom_call.1} parent=1 // pred_region
      %49 = dma.done [#allocation6], 80
    $region25: #{tpu_custom_call.1} parent=1 // pred_fallthru
      _
    %v50 = vld [vmem:[#allocation2] sm:$0x3]
    %v51 = vxor.u32 %v50, 2147483648
    %v52 = vmul.f32 %v51, 1.442695
    %v53 = vpow.pop %v52
    %v54 = vadd.f32 %v53, 1.0
    %v55 = vrcp.pop %v54
    %v56 = vmul.f32 1.0, %v55
    %v57 = vmul.f32 %v50, %v56
    %v58 = vld [vmem:[#allocation5] sm:$0xff]
    %v59 = vld [vmem:[#allocation5 + $0x8] sm:$0xff]
    %v60 = vld [vmem:[#allocation5 + $0x10] sm:$0xff]
    %v61 = vld [vmem:[#allocation5 + $0x18] sm:$0xff]
    %v62 = vld [vmem:[#allocation5 + $0x20] sm:$0xff]
    %v63 = vld [vmem:[#allocation7] sm:$0x1f]
    %v65 = vlaneseq
    %v66 = vshrl.u32 %v65, 7
    %v67 = vsub.s32 0, %v66
    %v68 = vrot.slane %v63, %v67
    %v69 = vlaneseq
    %v70 = vshrl.u32 %v69, 7
    %v71 = vsub.s32 1, %v70
    %v72 = vrot.slane %v63, %v71
    %v73 = vlaneseq
    %v74 = vshrl.u32 %v73, 7
    %v75 = vsub.s32 2, %v74
    %v76 = vrot.slane %v63, %v75
    %v77 = vlaneseq
    %v78 = vshrl.u32 %v77, 7
    %v79 = vsub.s32 3, %v78
    %v80 = vrot.slane %v63, %v79
    %v81 = vlaneseq
    %v82 = vshrl.u32 %v81, 7
    %v83 = vsub.s32 4, %v82
    %v84 = vrot.slane %v63, %v83
    %vm90 = vcmask 64512
    %v92 = vsel %vm90, %v57, 0
    %94 = vmatprep.subr.mxu0 %v59
    %95 = vmatpush1.msra.mxu0 %v58
    %96 = vmatprep.subr.mxu0 0.0
    %97 = vmatpush1.msra.mxu0 0.0
    %98 = vmatprep.subr.mxu0 0.0
    %99 = vmatpush1.msra.mxu0 0.0
    %100 = vmatprep.subr.mxu0 0.0
    %101 = vmatpush1.msra.mxu0 0.0
    %102 = vmatprep.subr.mxu0 0.0
    %103 = vmatpush1.msra.mxu0 0.0
    %104 = vmatprep.subr.mxu0 0.0
    %105 = vmatpush1.msra.mxu0 0.0
    %106 = vmatprep.subr.mxu0 0.0
    %107 = vmatpush1.msra.mxu0 0.0
    %108 = vmatprep.subr.mxu0 0.0
    %109 = vmatpush1.msra.mxu0 0.0
    %110 = vmatprep.subr.mxu0 0.0
    %111 = vmatpush1.msra.mxu0 0.0
    %112 = vmatprep.subr.mxu0 0.0
    %113 = vmatpush1.msra.mxu0 0.0
    %114 = vmatprep.subr.mxu0 0.0
    %115 = vmatpush1.msra.mxu0 0.0
    %116 = vmatprep.subr.mxu0 0.0
    %117 = vmatpush1.msra.mxu0 0.0
    %118 = vmatprep.subr.mxu0 0.0
    %119 = vmatpush1.msra.mxu0 0.0
    %120 = vmatprep.subr.mxu0 0.0
    %121 = vmatpush1.msra.mxu0 0.0
    %122 = vmatprep.subr.mxu0 0.0
    %123 = vmatpush1.msra.mxu0 0.0
    %124 = vmatprep.subr.mxu0 0.0
    %125 = vmatpush1.msra.mxu0 0.0
    %126 = vmatprep.subr.mxu0 0.0
    %127 = vmatpush1.msra.mxu0 0.0
    %128 = vmatprep.subr.mxu0 0.0
    %129 = vmatpush1.msra.mxu0 0.0
    %130 = vmatprep.subr.mxu0 0.0
    %131 = vmatpush1.msra.mxu0 0.0
    %132 = vmatprep.subr.mxu0 0.0
    %133 = vmatpush1.msra.mxu0 0.0
    %134 = vmatprep.subr.mxu0 0.0
    %135 = vmatpush1.msra.mxu0 0.0
    %136 = vmatprep.subr.mxu0 0.0
    %137 = vmatpush1.msra.mxu0 0.0
    %138 = vmatprep.subr.mxu0 0.0
    %139 = vmatpush1.msra.mxu0 0.0
    %140 = vmatprep.subr.mxu0 0.0
    %141 = vmatpush1.msra.mxu0 0.0
    %142 = vmatprep.subr.mxu0 0.0
    %143 = vmatpush1.msra.mxu0 0.0
    %144 = vmatprep.subr.mxu0 0.0
    %145 = vmatpush1.msra.mxu0 0.0
    %146 = vmatprep.subr.mxu0 0.0
    %147 = vmatpush1.msra.mxu0 0.0
    %148 = vmatprep.subr.mxu0 0.0
    %149 = vmatpush1.msra.mxu0 0.0
    %150 = vmatprep.subr.mxu0 0.0
    %151 = vmatpush1.msra.mxu0 0.0
    %152 = vmatprep.subr.mxu0 0.0
    %153 = vmatpush1.msra.mxu0 0.0
    %154 = vmatprep.subr.mxu0 0.0
    %155 = vmatpush1.msra.mxu0 0.0
    %156 = vmatprep.subr.mxu0 0.0
    %157 = vmatpush1.msra.mxu0 0.0
    %158 = vmatprep.mubr.f32.mxu0 0.0
    %159 = vmatmul.mubr.f32.gmra.mrb[0].mxu0 %v92
    %v160 = vpop.f32.mrb[0].mxu0
    %v161 = vadd.f32 %v68, %v160
    %v162 = vpop.f32.mrb[0].mxu0
    %v163 = vadd.f32 %v72, %v162
    %164 = vdwg.mxu0
    %165 = vmatprep.subr.mxu0 %v61
    %166 = vmatpush1.msra.mxu0 %v60
    %167 = vmatprep.subr.mxu0 0.0
    %168 = vmatpush1.msra.mxu0 0.0
    %169 = vmatprep.subr.mxu0 0.0
    %170 = vmatpush1.msra.mxu0 0.0
    %171 = vmatprep.subr.mxu0 0.0
    %172 = vmatpush1.msra.mxu0 0.0
    %173 = vmatprep.subr.mxu0 0.0
    %174 = vmatpush1.msra.mxu0 0.0
    %175 = vmatprep.subr.mxu0 0.0
    %176 = vmatpush1.msra.mxu0 0.0
    %177 = vmatprep.subr.mxu0 0.0
    %178 = vmatpush1.msra.mxu0 0.0
    %179 = vmatprep.subr.mxu0 0.0
    %180 = vmatpush1.msra.mxu0 0.0
    %181 = vmatprep.subr.mxu0 0.0
    %182 = vmatpush1.msra.mxu0 0.0
    %183 = vmatprep.subr.mxu0 0.0
    %184 = vmatpush1.msra.mxu0 0.0
    %185 = vmatprep.subr.mxu0 0.0
    %186 = vmatpush1.msra.mxu0 0.0
    %187 = vmatprep.subr.mxu0 0.0
    %188 = vmatpush1.msra.mxu0 0.0
    %189 = vmatprep.subr.mxu0 0.0
    %190 = vmatpush1.msra.mxu0 0.0
    %191 = vmatprep.subr.mxu0 0.0
    %192 = vmatpush1.msra.mxu0 0.0
    %193 = vmatprep.subr.mxu0 0.0
    %194 = vmatpush1.msra.mxu0 0.0
    %195 = vmatprep.subr.mxu0 0.0
    %196 = vmatpush1.msra.mxu0 0.0
    %197 = vmatprep.subr.mxu0 0.0
    %198 = vmatpush1.msra.mxu0 0.0
    %199 = vmatprep.subr.mxu0 0.0
    %200 = vmatpush1.msra.mxu0 0.0
    %201 = vmatprep.subr.mxu0 0.0
    %202 = vmatpush1.msra.mxu0 0.0
    %203 = vmatprep.subr.mxu0 0.0
    %204 = vmatpush1.msra.mxu0 0.0
    %205 = vmatprep.subr.mxu0 0.0
    %206 = vmatpush1.msra.mxu0 0.0
    %207 = vmatprep.subr.mxu0 0.0
    %208 = vmatpush1.msra.mxu0 0.0
    %209 = vmatprep.subr.mxu0 0.0
    %210 = vmatpush1.msra.mxu0 0.0
    %211 = vmatprep.subr.mxu0 0.0
    %212 = vmatpush1.msra.mxu0 0.0
    %213 = vmatprep.subr.mxu0 0.0
    %214 = vmatpush1.msra.mxu0 0.0
    %215 = vmatprep.subr.mxu0 0.0
    %216 = vmatpush1.msra.mxu0 0.0
    %217 = vmatprep.subr.mxu0 0.0
    %218 = vmatpush1.msra.mxu0 0.0
    %219 = vmatprep.subr.mxu0 0.0
    %220 = vmatpush1.msra.mxu0 0.0
    %221 = vmatprep.subr.mxu0 0.0
    %222 = vmatpush1.msra.mxu0 0.0
    %223 = vmatprep.subr.mxu0 0.0
    %224 = vmatpush1.msra.mxu0 0.0
    %225 = vmatprep.subr.mxu0 0.0
    %226 = vmatpush1.msra.mxu0 0.0
    %227 = vmatprep.subr.mxu0 0.0
    %228 = vmatpush1.msra.mxu0 0.0
    %229 = vmatprep.mubr.f32.mxu0 0.0
    %230 = vmatmul.mubr.f32.gmra.mrb[0].mxu0 %v92
    %v231 = vpop.f32.mrb[0].mxu0
    %v232 = vadd.f32 %v76, %v231
    %v233 = vpop.f32.mrb[0].mxu0
    %v234 = vadd.f32 %v80, %v233
    %235 = vdwg.mxu0
    %236 = vmatprep.subr.mxu0 0.0
    %237 = vmatpush1.msra.mxu0 %v62
    %238 = vmatprep.subr.mxu0 0.0
    %239 = vmatpush1.msra.mxu0 0.0
    %240 = vmatprep.subr.mxu0 0.0
    %241 = vmatpush1.msra.mxu0 0.0
    %242 = vmatprep.subr.mxu0 0.0
    %243 = vmatpush1.msra.mxu0 0.0
    %244 = vmatprep.subr.mxu0 0.0
    %245 = vmatpush1.msra.mxu0 0.0
    %246 = vmatprep.subr.mxu0 0.0
    %247 = vmatpush1.msra.mxu0 0.0
    %248 = vmatprep.subr.mxu0 0.0
    %249 = vmatpush1.msra.mxu0 0.0
    %250 = vmatprep.subr.mxu0 0.0
    %251 = vmatpush1.msra.mxu0 0.0
    %252 = vmatprep.subr.mxu0 0.0
    %253 = vmatpush1.msra.mxu0 0.0
    %254 = vmatprep.subr.mxu0 0.0
    %255 = vmatpush1.msra.mxu0 0.0
    %256 = vmatprep.subr.mxu0 0.0
    %257 = vmatpush1.msra.mxu0 0.0
    %258 = vmatprep.subr.mxu0 0.0
    %259 = vmatpush1.msra.mxu0 0.0
    %260 = vmatprep.subr.mxu0 0.0
    %261 = vmatpush1.msra.mxu0 0.0
    %262 = vmatprep.subr.mxu0 0.0
    %263 = vmatpush1.msra.mxu0 0.0
    %264 = vmatprep.subr.mxu0 0.0
    %265 = vmatpush1.msra.mxu0 0.0
    %266 = vmatprep.subr.mxu0 0.0
    %267 = vmatpush1.msra.mxu0 0.0
    %268 = vmatprep.subr.mxu0 0.0
    %269 = vmatpush1.msra.mxu0 0.0
    %270 = vmatprep.subr.mxu0 0.0
    %271 = vmatpush1.msra.mxu0 0.0
    %272 = vmatprep.subr.mxu0 0.0
    %273 = vmatpush1.msra.mxu0 0.0
    %274 = vmatprep.subr.mxu0 0.0
    %275 = vmatpush1.msra.mxu0 0.0
    %276 = vmatprep.subr.mxu0 0.0
    %277 = vmatpush1.msra.mxu0 0.0
    %278 = vmatprep.subr.mxu0 0.0
    %279 = vmatpush1.msra.mxu0 0.0
    %280 = vmatprep.subr.mxu0 0.0
    %281 = vmatpush1.msra.mxu0 0.0
    %282 = vmatprep.subr.mxu0 0.0
    %283 = vmatpush1.msra.mxu0 0.0
    %284 = vmatprep.subr.mxu0 0.0
    %285 = vmatpush1.msra.mxu0 0.0
    %286 = vmatprep.subr.mxu0 0.0
    %287 = vmatpush1.msra.mxu0 0.0
    %288 = vmatprep.subr.mxu0 0.0
    %289 = vmatpush1.msra.mxu0 0.0
    %290 = vmatprep.subr.mxu0 0.0
    %291 = vmatpush1.msra.mxu0 0.0
    %292 = vmatprep.subr.mxu0 0.0
    %293 = vmatpush1.msra.mxu0 0.0
    %294 = vmatprep.subr.mxu0 0.0
    %295 = vmatpush1.msra.mxu0 0.0
    %296 = vmatprep.subr.mxu0 0.0
    %297 = vmatpush1.msra.mxu0 0.0
    %298 = vmatprep.subr.mxu0 0.0
    %299 = vmatpush1.msra.mxu0 0.0
    %300 = vmatprep.mubr.f32.mxu0 0.0
    %301 = vmatmul.mubr.f32.gmra.mrb[0].mxu0 %v92
    %v302 = vpop.f32.mrb[0].mxu0
    %v303 = vadd.f32 %v84, %v302
    %v304 = vpop.f32.mrb[0].mxu0
    %305 = vdwg.mxu0
    %v311 = vcombine.low %v161, %v163
    %v312 = vcombine.low %v232, %v234
    %v314 = vunpack.c.l.s4 1983009808
    %v315 = vunpack.c.0.s8 %v314
    %v316 = vlaneseq
    %v317 = vshrl.u32 %v316, 7
    %v318 = vsub.s32 %v315, %v317
    %v319 = vrot.slane %v311, %v318
    %v321 = vunpack.c.l.s4 1983009808
    %v322 = vunpack.c.0.s8 %v321
    %v323 = vlaneseq
    %v324 = vshrl.u32 %v323, 7
    %v325 = vsub.s32 %v322, %v324
    %v326 = vrot.slane %v312, %v325
    %v327 = vcombine.low %v319, %v326
    %v329 = vunpack.c.l.s4 1983009808
    %v330 = vunpack.c.0.s8 %v329
    %v331 = vlaneseq
    %v332 = vshrl.u32 %v331, 7
    %v333 = vsub.s32 %v330, %v332
    %v334 = vrot.slane %v303, %v333
    %337 = vst [vmem:[#allocation8] sm:$0xff] %v327
    %vm338 = vcmask 517120
    %339 = vst.msk [vmem:[#allocation8 + $0x8] sm:$0x3] %vm338, %v334
    // Predicated region
    $region26: #{tpu_custom_call.1} parent=1 // pred_check
      _
    $region27: #{tpu_custom_call.1} parent=1 // pred_check_branch
      %341 = sbr.rel (0) target = $region29
    $region28: #{tpu_custom_call.1} parent=1 // pred_region
      %s343 = ssub.s32 160, 160
      %344 = vsyncadd [#allocation4], %s343
      %s346 = sshll.u32 [#allocation8], 4
      %s347 = int_to_ptr.vmem [resolvable:$true] %s346
      %349 = dma.vmem_to_hbm [thread:$0]  %s347, 160, %s3, [#allocation4]
    $region29: #{tpu_custom_call.1} parent=1 // pred_fallthru
      _
    // Predicated region
    $region30: #{tpu_custom_call.1} parent=1 // pred_check
      _
    $region31: #{tpu_custom_call.1} parent=1 // pred_check_branch
      %351 = sbr.rel (0) target = $region33
    $region32: #{tpu_custom_call.1} parent=1 // pred_region
      %352 = dma.done [#allocation4], 160
    $region33: #{tpu_custom_call.1} parent=1 // pred_fallthru
      _
    %353 = vsyncpa [#allocation3], 1
    %354 = vsyncpa [#allocation6], 1
    %355 = vsyncpa [#allocation4], 1

</llo_original>
